<compile_context>
chip_gen: v7x
topology: tpu7x:2x2x1
jax: 0.10.0
libtpu: 0.0.40
codegen_flags: <defaults>
</compile_context>

<pallas_src>
import jax
import jax.numpy as jnp
from jax import lax
from jax.experimental import pallas as pl
from jax.experimental.pallas import tpu as pltpu


def _round_up(v, m):
    return (v + m - 1) // m * m


def _cdiv(a, b):
    return (a + b - 1) // b


def _vmem_limit(block_bytes):
    # Double-buffered blocks + resident params + margin; clamp below v7x's 64 MiB.
    return int(min(max(int(2.5 * block_bytes) + (2 << 20), 16 << 20), 48 << 20))


# ---------------------------------------------------------------------------
# Pass 1: gate + BN partial stats on channels-first tiles [C, TILE_N].
#   theta_x = theta_w @ x
#   f       = relu(theta_x + phi_up)
#   sigm    = sigmoid(sum_c psi_w[c] * f[c] + psi_b)
#   y       = sigm * x
#   wy      = W_w @ y        (computed in-register only; NOT stored to HBM)
# Emits sigm and per-tile per-channel [sum(wy), sum(wy^2)] packed in one block.
# ---------------------------------------------------------------------------
def _gate_stats_kernel(x_ref, phi_ref, theta_w_ref, psi_w_ref, psi_b_ref, w_w_ref,
                       sigm_ref, stats_ref):
    x = x_ref[0]                                                    # [F_l,  T]
    phi = phi_ref[0]                                                # [F_int, T]
    theta_x = jnp.dot(theta_w_ref[...], x,
                      preferred_element_type=jnp.float32)           # [F_int, T]
    f = jnp.maximum(theta_x + phi, 0.0)                             # ReLU
    # psi: sublane reduce over F_int rows -> lane-dense [1, T]
    psi = jnp.sum(f * psi_w_ref[...], axis=0, keepdims=True)
    sigm = jax.nn.sigmoid(psi + psi_b_ref[0])                       # [1, T]
    sigm_ref[0] = sigm

    y = sigm * x                                                    # [F_l, T]
    wy = jnp.dot(w_w_ref[...], y, preferred_element_type=jnp.float32)
    # Packed per-tile BN moments: column 0 = sum, column 1 = sum of squares.
    stats_ref[0, 0, :, 0:1] = jnp.sum(wy, axis=1, keepdims=True)    # [F_l, 1]
    stats_ref[0, 0, :, 1:2] = jnp.sum(wy * wy, axis=1, keepdims=True)


def _gate_stats_pass(x_cf, phi_cf, theta_w, psi_w_col, psi_b, w_w, tile_n, vmem_bytes):
    B, F_l, N = x_cf.shape
    F_int = phi_cf.shape[1]
    nt = N // tile_n

    def tile_spec(c):
        return pl.BlockSpec((1, c, tile_n), lambda b, n: (b, 0, n))

    def const_spec(shp):
        # same block every grid step -> parameter stays VMEM-resident
        return pl.BlockSpec(shp, lambda b, n: (0, 0))

    return pl.pallas_call(
        _gate_stats_kernel,
        grid=(B, nt),
        in_specs=[
            tile_spec(F_l),                                        # x
            tile_spec(F_int),                                      # phi_up
            const_spec((F_int, F_l)),                              # theta_w
            const_spec((F_int, 1)),                                # psi_w (column)
            pl.BlockSpec(memory_space=pltpu.MemorySpace.SMEM),     # psi_b scalar
            const_spec((F_l, F_l)),                                # W_w
        ],
        out_specs=(
            pl.BlockSpec((1, 1, tile_n), lambda b, n: (b, 0, n)),        # sigm
            pl.BlockSpec((1, 1, F_l, 2), lambda b, n: (b, n, 0, 0)),     # packed stats
        ),
        out_shape=(
            jax.ShapeDtypeStruct((B, 1, N), jnp.float32),
            jax.ShapeDtypeStruct((B, nt, F_l, 2), jnp.float32),
        ),
        compiler_params=pltpu.CompilerParams(
            dimension_semantics=("parallel", "parallel"),
            vmem_limit_bytes=vmem_bytes),
    )(x_cf, phi_cf, theta_w, psi_w_col, psi_b, w_w)


# ---------------------------------------------------------------------------
# Pass 2: recompute y = sigm * x and emit BN(W @ y) in one fused kernel.
#   out = (scale[:,None] * W_w) @ y + shift         (scale folded into W in XLA)
# ---------------------------------------------------------------------------
def _wy_bn_kernel(x_ref, sigm_ref, w_eff_ref, shift_ref, o_ref):
    y = sigm_ref[0] * x_ref[0]                                      # [F_l, T]
    o_ref[0] = (jnp.dot(w_eff_ref[...], y, preferred_element_type=jnp.float32)
                + shift_ref[...])


def _wy_bn_pass(x_cf, sigm_cf, w_eff, shift_col, tile_n, vmem_bytes):
    B, F_l, N = x_cf.shape
    nt = N // tile_n
    x_spec = pl.BlockSpec((1, F_l, tile_n), lambda b, n: (b, 0, n))
    s_spec = pl.BlockSpec((1, 1, tile_n), lambda b, n: (b, 0, n))
    const_w = pl.BlockSpec((F_l, F_l), lambda b, n: (0, 0))
    const_c = pl.BlockSpec((F_l, 1), lambda b, n: (0, 0))
    return pl.pallas_call(
        _wy_bn_kernel,
        grid=(B, nt),
        in_specs=[x_spec, s_spec, const_w, const_c],
        out_specs=x_spec,
        out_shape=jax.ShapeDtypeStruct((B, F_l, N), jnp.float32),
        compiler_params=pltpu.CompilerParams(
            dimension_semantics=("parallel", "parallel"),
            vmem_limit_bytes=vmem_bytes),
    )(x_cf, sigm_cf, w_eff, shift_col)


# ---------------------------------------------------------------------------
# Glue: trilinear interpolation, align_corners=True, channels-first (pure JAX).
# TODO(synk): the separable upsample of the tiny coarse phi(g) grid could be fused
#             into pass 1 (small interpolation matmuls); left to XLA on purpose.
# ---------------------------------------------------------------------------
def _trilinear_align_corners_cf(x, out_size):
    # x: [B, C, Dg, Hg, Wg] -> [B, C, D, H, W]
    def axis_interp(arr, axis, in_s, out_s):
        if out_s == in_s:
            return arr
        if out_s == 1 or in_s == 1:
            idx = jnp.zeros((out_s,), jnp.int32)
            return jnp.take(arr, idx, axis=axis)
        scale = (in_s - 1) / (out_s - 1)
        c = jnp.arange(out_s, dtype=jnp.float32) * scale
        lo = jnp.clip(jnp.floor(c).astype(jnp.int32), 0, in_s - 1)
        hi = jnp.clip(lo + 1, 0, in_s - 1)
        frac = c - lo.astype(jnp.float32)
        shape = [1] * arr.ndim
        shape[axis] = out_s
        frac = frac.reshape(shape)
        return (jnp.take(arr, lo, axis=axis) * (1.0 - frac)
                + jnp.take(arr, hi, axis=axis) * frac)

    _, _, Dg, Hg, Wg = x.shape
    D, H, W = out_size
    x = axis_interp(x, 2, Dg, D)
    x = axis_interp(x, 3, Hg, H)
    x = axis_interp(x, 4, Wg, W)
    return x


# ---------------------------------------------------------------------------
# Full forward (mode='concatenation', sub_sample_factor=1).
# ---------------------------------------------------------------------------
def grid_attention_gate_3d(x, g, params, max_tile_n=65536):
    # x: [B, F_l, D, H, W], g: [B, F_g, Dg, Hg, Wg]  (PyTorch NCDHW / channels-first)
    B, F_l, D, H, W = x.shape
    Bg = g.shape[0]
    assert B == Bg
    F_int = params["theta_w"].shape[0]
    N_sp = D * H * W

    # phi(g) 1x1x1 conv + bias + trilinear upsample to theta_x spatial (== x spatial,
    # since sub_sample_factor=1): tiny coarse-grid work, left to XLA.
    phi_g = (jnp.einsum("oc,bcdhw->bodhw", params["phi_w"], g)
             + params["phi_b"].reshape(1, F_int, 1, 1, 1))
    phi_up = _trilinear_align_corners_cf(phi_g, (D, H, W))

    # Channels-first flat layout: pure reshape, no transpose.
    x_cf = x.reshape(B, F_l, N_sp).astype(jnp.float32)
    phi_cf = phi_up.reshape(B, F_int, N_sp).astype(jnp.float32)

    # Lane-dense tiling: pick the tile count first so padding is at most ~128*nt cols.
    nt = max(1, _cdiv(N_sp, max_tile_n))
    if B * nt < 2 and N_sp >= 256:
        nt = 2                      # keep >=2 grid points so both v7x cores get work
    tile_n = _round_up(_cdiv(N_sp, nt), 128)
    n_pad = nt * tile_n
    if n_pad != N_sp:
        # zero-padding keeps wy == 0 on padded columns -> no effect on BN sums.
        pad = ((0, 0), (0, 0), (0, n_pad - N_sp))
        x_cf = jnp.pad(x_cf, pad)
        phi_cf = jnp.pad(phi_cf, pad)

    # VMEM limits from actual per-step block bytes (covers v5e's 16 MiB default).
    blk1 = 4 * tile_n * (F_l + F_int + 1) + 4 * F_l * 2 + 4 * (F_int * (F_l + 1) + F_l * F_l)
    blk2 = 4 * tile_n * (2 * F_l + 1) + 4 * (F_l * F_l + F_l)

    W_w = params["W_w"].astype(jnp.float32)
    sigm_pad, tstats = _gate_stats_pass(
        x_cf, phi_cf,
        params["theta_w"].astype(jnp.float32),
        params["psi_w"].reshape(F_int, 1).astype(jnp.float32),
        params["psi_b"].reshape(1).astype(jnp.float32),
        W_w, tile_n, _vmem_limit(blk1))

    # BatchNorm3d (training-mode) stats from per-tile partial sums (tiny, done in XLA).
    n_total = B * N_sp
    st = jnp.sum(tstats, axis=(0, 1))                   # [F_l, 2]
    mean = st[:, 0] / n_total
    var = jnp.maximum(st[:, 1] / n_total - mean * mean, 0.0)   # biased var, >= 0 guard
    scale = params["bn_gamma"].astype(jnp.float32) * lax.rsqrt(var + 1e-5)
    shift = params["bn_beta"].astype(jnp.float32) - mean * scale

    # Fold BN scale into W so pass 2 is one matmul + add (no wy HBM round trip).
    w_eff = scale[:, None] * W_w
    wy_bn = _wy_bn_pass(x_cf, sigm_pad, w_eff,
                        shift.reshape(F_l, 1).astype(jnp.float32),
                        tile_n, _vmem_limit(blk2))

    if n_pad != N_sp:
        wy_bn = wy_bn[:, :, :N_sp]
        sigm_flat = sigm_pad[:, :, :N_sp]
    else:
        sigm_flat = sigm_pad

    W_y = wy_bn.reshape(B, F_l, D, H, W)
    # Second F.interpolate(sigm_psi_f, size=x spatial) is the identity here because
    # sub_sample_factor=1 (theta_x spatial == x spatial).
    sigm = sigm_flat.reshape(B, 1, D, H, W)
    return W_y, sigm


# ---------------------------------------------------------------------------
# Pure-JAX reference (same math, no Pallas) for verification.
# ---------------------------------------------------------------------------
def reference_forward(x, g, params):
    B, F_l, D, H, W = x.shape
    F_int = params["theta_w"].shape[0]
    phi_g = (jnp.einsum("oc,bcdhw->bodhw", params["phi_w"], g)
             + params["phi_b"].reshape(1, F_int, 1, 1, 1))
    phi_up = _trilinear_align_corners_cf(phi_g, (D, H, W))
    theta_x = jnp.einsum("oc,bcdhw->bodhw", params["theta_w"], x)
    f = jnp.maximum(theta_x + phi_up, 0.0)
    psi = jnp.einsum("c,bcdhw->bdhw", params["psi_w"], f)[:, None] + params["psi_b"][0]
    sigm = jax.nn.sigmoid(psi)
    y = sigm * x
    wy = jnp.einsum("oc,bcdhw->bodhw", params["W_w"], y)
    mean = jnp.mean(wy, axis=(0, 2, 3, 4), keepdims=True)
    var = jnp.mean(wy * wy, axis=(0, 2, 3, 4), keepdims=True) - mean * mean
    wy = ((wy - mean) * lax.rsqrt(var + 1e-5)
          * params["bn_gamma"].reshape(1, F_l, 1, 1, 1)
          + params["bn_beta"].reshape(1, F_l, 1, 1, 1))
    return wy, sigm


def init_params(key, F_l, F_g, F_int):
    ks = jax.random.split(key, 5)
    return dict(
        # Conv3d weights [C_out, C_in, 1, 1, 1] stored as [C_out, C_in] matrices.
        theta_w=0.1 * jax.random.normal(ks[0], (F_int, F_l), jnp.float32),
        phi_w=0.1 * jax.random.normal(ks[1], (F_int, F_g), jnp.float32),
        phi_b=0.1 * jax.random.normal(ks[2], (F_int,), jnp.float32),
        psi_w=0.1 * jax.random.normal(ks[3], (F_int,), jnp.float32),
        psi_b=jnp.full((1,), 0.05, jnp.float32),
        W_w=0.1 * jax.random.normal(ks[4], (F_l, F_l), jnp.float32),
        bn_gamma=jnp.ones((F_l,), jnp.float32),    # BatchNorm3d default init
        bn_beta=jnp.zeros((F_l,), jnp.float32),
    )


if __name__ == "__main__":
    key = jax.random.PRNGKey(0)
    kx, kg, kp = jax.random.split(key, 3)

    B, F_l, F_g = 2, 8, 16
    F_int = F_l // 2                      # module default
    D = H = W = 8                         # x spatial
    Dg = Hg = Wg = 4                      # g spatial (coarser gating signal)

    x = jax.random.normal(kx, (B, F_l, D, H, W), jnp.float32)
    g = jax.random.normal(kg, (B, F_g, Dg, Hg, Wg), jnp.float32)
    params = init_params(kp, F_l, F_g, F_int)

    W_y, sigm = grid_attention_gate_3d(x, g, params)
    jax.block_until_ready((W_y, sigm))

    W_y_ref, sigm_ref = reference_forward(x, g, params)
    assert W_y.shape == (B, F_l, D, H, W)
    assert sigm.shape == (B, 1, D, H, W)
    assert jnp.allclose(W_y, W_y_ref, rtol=1e-4, atol=1e-4)
    assert jnp.allclose(sigm, sigm_ref, rtol=1e-4, atol=1e-5)

    print("KERNEL_OK")
</pallas_src>

<mosaic_0001>
module attributes {stable_mosaic.version = 11 : i64} {
  func.func @_gate_stats_kernel(%arg0: i32, %arg1: i32, %arg2: memref<1x8x512xf32, #tpu.memory_space<vmem>>, %arg3: memref<1x4x512xf32, #tpu.memory_space<vmem>>, %arg4: memref<4x8xf32, #tpu.memory_space<vmem>>, %arg5: memref<4x1xf32, #tpu.memory_space<vmem>>, %arg6: memref<1xf32, #tpu.memory_space<smem>>, %arg7: memref<8x8xf32, #tpu.memory_space<vmem>>, %arg8: memref<1x1x512xf32, #tpu.memory_space<vmem>>, %arg9: memref<1x1x8x2xf32, #tpu.memory_space<vmem>>) attributes {dimension_semantics = [#tpu.dimension_semantics<parallel>, #tpu.dimension_semantics<parallel>], iteration_bounds = array<i64: 2, 1>, scalar_prefetch = 0 : i64, scratch_operands = 0 : i64, tpu.core_type = #tpu.core_type<tc>, window_params = [{transform_indices = @transform_0, window_bounds = array<i64: 1, 8, 512>}, {transform_indices = @transform_1, window_bounds = array<i64: 1, 4, 512>}, {pipeline_mode = #tpu.pipeline_mode<synchronous>, transform_indices = @transform_2, window_bounds = array<i64: 4, 8>}, {pipeline_mode = #tpu.pipeline_mode<synchronous>, transform_indices = @transform_3, window_bounds = array<i64: 4, 1>}, {transform_indices = @transform_4, window_bounds = array<i64: 1>}, {pipeline_mode = #tpu.pipeline_mode<synchronous>, transform_indices = @transform_5, window_bounds = array<i64: 8, 8>}, {transform_indices = @transform_6, window_bounds = array<i64: 1, 1, 512>}, {transform_indices = @transform_7, window_bounds = array<i64: 1, 1, 8, 2>}]} {
    %c0 = arith.constant 0 : index
    %c0_0 = arith.constant 0 : index
    %c0_1 = arith.constant 0 : index
    %0 = vector.load %arg2[%c0, %c0_0, %c0_1] : memref<1x8x512xf32, #tpu.memory_space<vmem>>, vector<1x8x512xf32>
    %1 = vector.shape_cast %0 : vector<1x8x512xf32> to vector<8x512xf32>
    %c0_2 = arith.constant 0 : index
    %c0_3 = arith.constant 0 : index
    %c0_4 = arith.constant 0 : index
    %2 = vector.load %arg3[%c0_2, %c0_3, %c0_4] : memref<1x4x512xf32, #tpu.memory_space<vmem>>, vector<1x4x512xf32>
    %3 = vector.shape_cast %2 : vector<1x4x512xf32> to vector<4x512xf32>
    %c0_5 = arith.constant 0 : index
    %c0_6 = arith.constant 0 : index
    %4 = vector.load %arg4[%c0_5, %c0_6] : memref<4x8xf32, #tpu.memory_space<vmem>>, vector<4x8xf32>
    %cst = arith.constant dense<0.000000e+00> : vector<4x512xf32>
    %5 = tpu.matmul %4, %1, %cst {dimension_numbers = #tpu.dot_dimension_numbers<[1], [0], [0], [1], [0, 0, 1, 1], [], []>} : vector<4x8xf32>, vector<8x512xf32>, vector<4x512xf32> -> vector<4x512xf32>
    %6 = arith.addf %5, %3 : vector<4x512xf32>
    %cst_7 = arith.constant 0.000000e+00 : f32
    %7 = vector.broadcast %cst_7 : f32 to vector<4x512xf32>
    %8 = arith.maximumf %6, %7 : vector<4x512xf32>
    %c0_8 = arith.constant 0 : index
    %c0_9 = arith.constant 0 : index
    %9 = vector.load %arg5[%c0_8, %c0_9] : memref<4x1xf32, #tpu.memory_space<vmem>>, vector<4x1xf32>
    %10 = vector.broadcast %9 : vector<4x1xf32> to vector<4x512xf32>
    %11 = arith.mulf %8, %10 : vector<4x512xf32>
    %cst_10 = arith.constant dense<0.000000e+00> : vector<512xf32>
    %12 = vector.multi_reduction <add>, %11, %cst_10 [0] : vector<4x512xf32> to vector<512xf32>
    %13 = vector.shape_cast %12 : vector<512xf32> to vector<1x512xf32>
    %c0_11 = arith.constant 0 : index
    %14 = memref.load %arg6[%c0_11] : memref<1xf32, #tpu.memory_space<smem>>
    %15 = vector.broadcast %14 : f32 to vector<1x512xf32>
    %16 = arith.addf %13, %15 : vector<1x512xf32>
    %17 = arith.negf %16 : vector<1x512xf32>
    %18 = math.exp %17 : vector<1x512xf32>
    %cst_12 = arith.constant 1.000000e+00 : f32
    %19 = vector.broadcast %cst_12 : f32 to vector<1x512xf32>
    %20 = arith.addf %19, %18 : vector<1x512xf32>
    %21 = arith.divf %19, %20 : vector<1x512xf32>
    %c0_13 = arith.constant 0 : index
    %c0_14 = arith.constant 0 : index
    %c0_15 = arith.constant 0 : index
    %22 = vector.load %arg8[%c0_13, %c0_14, %c0_15] : memref<1x1x512xf32, #tpu.memory_space<vmem>>, vector<1x1x512xf32>
    %23 = vector.shape_cast %22 : vector<1x1x512xf32> to vector<1x512xf32>
    %24 = vector.shape_cast %21 : vector<1x512xf32> to vector<1x1x512xf32>
    tpu.vector_store %arg8[%c0_13, %c0_14, %c0_15], %24 {strides = array<i32>} : memref<1x1x512xf32, #tpu.memory_space<vmem>>, vector<1x1x512xf32>,
    %25 = vector.broadcast %21 : vector<1x512xf32> to vector<8x512xf32>
    %26 = arith.mulf %25, %1 : vector<8x512xf32>
    %c0_16 = arith.constant 0 : index
    %c0_17 = arith.constant 0 : index
    %27 = vector.load %arg7[%c0_16, %c0_17] : memref<8x8xf32, #tpu.memory_space<vmem>>, vector<8x8xf32>
    %cst_18 = arith.constant dense<0.000000e+00> : vector<8x512xf32>
    %28 = tpu.matmul %27, %26, %cst_18 {dimension_numbers = #tpu.dot_dimension_numbers<[1], [0], [0], [1], [0, 0, 1, 1], [], []>} : vector<8x8xf32>, vector<8x512xf32>, vector<8x512xf32> -> vector<8x512xf32>
    %cst_19 = arith.constant dense<0.000000e+00> : vector<8xf32>
    %29 = vector.multi_reduction <add>, %28, %cst_19 [1] : vector<8x512xf32> to vector<8xf32>
    %30 = vector.shape_cast %29 : vector<8xf32> to vector<8x1xf32>
    %c0_20 = arith.constant 0 : index
    %c0_21 = arith.constant 0 : index
    %c0_22 = arith.constant 0 : index
    %c0_23 = arith.constant 0 : index
    %31 = vector.load %arg9[%c0_20, %c0_21, %c0_22, %c0_23] : memref<1x1x8x2xf32, #tpu.memory_space<vmem>>, vector<1x1x8x1xf32>
    %32 = vector.shape_cast %31 : vector<1x1x8x1xf32> to vector<8x1xf32>
    %33 = vector.shape_cast %30 : vector<8x1xf32> to vector<1x1x8x1xf32>
    tpu.vector_store %arg9[%c0_20, %c0_21, %c0_22, %c0_23], %33 {strides = array<i32>} : memref<1x1x8x2xf32, #tpu.memory_space<vmem>>, vector<1x1x8x1xf32>,
    %34 = arith.mulf %28, %28 : vector<8x512xf32>
    %cst_24 = arith.constant dense<0.000000e+00> : vector<8xf32>
    %35 = vector.multi_reduction <add>, %34, %cst_24 [1] : vector<8x512xf32> to vector<8xf32>
    %36 = vector.shape_cast %35 : vector<8xf32> to vector<8x1xf32>
    %c0_25 = arith.constant 0 : index
    %c0_26 = arith.constant 0 : index
    %c0_27 = arith.constant 0 : index
    %c1 = arith.constant 1 : index
    %37 = vector.load %arg9[%c0_25, %c0_26, %c0_27, %c1] : memref<1x1x8x2xf32, #tpu.memory_space<vmem>>, vector<1x1x8x1xf32>
    %38 = vector.shape_cast %37 : vector<1x1x8x1xf32> to vector<8x1xf32>
    %39 = vector.shape_cast %36 : vector<8x1xf32> to vector<1x1x8x1xf32>
    tpu.vector_store %arg9[%c0_25, %c0_26, %c0_27, %c1], %39 {strides = array<i32>} : memref<1x1x8x2xf32, #tpu.memory_space<vmem>>, vector<1x1x8x1xf32>,
    return
  }
  func.func @transform_0(%arg0: i32, %arg1: i32) -> (i32, i32, i32) {
    %c0_i32 = arith.constant 0 : i32
    %c0_i32_0 = arith.constant 0 : i32
    return %arg0, %c0_i32, %arg1 : i32, i32, i32
  }
  func.func @transform_1(%arg0: i32, %arg1: i32) -> (i32, i32, i32) {
    %c0_i32 = arith.constant 0 : i32
    %c0_i32_0 = arith.constant 0 : i32
    return %arg0, %c0_i32, %arg1 : i32, i32, i32
  }
  func.func @transform_2(%arg0: i32, %arg1: i32) -> (i32, i32) {
    %c0_i32 = arith.constant 0 : i32
    %c0_i32_0 = arith.constant 0 : i32
    %c0_i32_1 = arith.constant 0 : i32
    return %c0_i32, %c0_i32_0 : i32, i32
  }
  func.func @transform_3(%arg0: i32, %arg1: i32) -> (i32, i32) {
    %c0_i32 = arith.constant 0 : i32
    %c0_i32_0 = arith.constant 0 : i32
    %c0_i32_1 = arith.constant 0 : i32
    return %c0_i32, %c0_i32_0 : i32, i32
  }
  func.func @transform_4(%arg0: i32, %arg1: i32) -> i32 {
    %c0_i32 = arith.constant 0 : i32
    %c0_i32_0 = arith.constant 0 : i32
    return %c0_i32 : i32
  }
  func.func @transform_5(%arg0: i32, %arg1: i32) -> (i32, i32) {
    %c0_i32 = arith.constant 0 : i32
    %c0_i32_0 = arith.constant 0 : i32
    %c0_i32_1 = arith.constant 0 : i32
    return %c0_i32, %c0_i32_0 : i32, i32
  }
  func.func @transform_6(%arg0: i32, %arg1: i32) -> (i32, i32, i32) {
    %c0_i32 = arith.constant 0 : i32
    %c0_i32_0 = arith.constant 0 : i32
    return %arg0, %c0_i32, %arg1 : i32, i32, i32
  }
  func.func @transform_7(%arg0: i32, %arg1: i32) -> (i32, i32, i32, i32) {
    %c0_i32 = arith.constant 0 : i32
    %c0_i32_0 = arith.constant 0 : i32
    %c0_i32_1 = arith.constant 0 : i32
    return %arg0, %arg1, %c0_i32, %c0_i32_0 : i32, i32, i32, i32
  }
}

</mosaic_0001>

<llo_original>
// kernel: tpu_custom_call.1
$region0: #{tpu_custom_call.1}
  #allocation0 [shape = 'u32[]', space=smem, size = 0x4, offset = 0x4, fixed_abs, tag = 'smem constant byte address 0x4 - core index']
  #allocation1 [shape = 'u32[144,128]{1,0:T(1,128)}', space=vmem, size = 0x12000, scoped, tag = 'internal scratch']
  #allocation2 [shape = 'f32[1]{0:T(128)S(6)}', space=smem, size = 0x200, scoped, tag = 'scoped memory for tpu_custom_call.1']
  %s0 = inlined_call_operand.hbm [shape: f32[2,8,512], index: 0, kind: input, shape index: {}]
  %s1 = inlined_call_operand.hbm [shape: f32[2,4,512], index: 1, kind: input, shape index: {}]
  %s2 = inlined_call_operand.vmem [shape: f32[4,8], index: 2, kind: input, shape index: {}]
  %s3 = inlined_call_operand.vmem [shape: f32[4,1], index: 3, kind: input, shape index: {}]
  %s4 = inlined_call_operand.<no memory space> [shape: f32[1], index: 4, kind: input, shape index: {}]
  %s5 = inlined_call_operand.vmem [shape: f32[8,8], index: 5, kind: input, shape index: {}]
  %s6 = inlined_call_operand.hbm [shape: f32[2,1,512], index: 6, kind: output, shape index: {0}]
  %s7 = inlined_call_operand.vmem [shape: f32[2,1,8,2], index: 7, kind: output, shape index: {1}]
  %8 = xla_tuple %s6, %s7
  %s9 = sld [smem:[#allocation0]]
  $region73: #{tpu_custom_call.1} parent=0
    _
  %s11 = ssub.s32 1, %s9
  %s12 = scalar_select 0, %s11, %s9
  %13 = sst [smem:[#allocation2]] %s4
  $region1: #{tpu_custom_call.1} parent=0
    #allocation3 [shape = 'u8[32768]{0}', space=vmem, size = 0x8000, scoped, tag = 'input window, operand 0']
    #allocation4 [shape = 's32[2]{0}', space=sflag, size = 0x8, scoped, tag = 'scoped memory for tpu_custom_call.1']
    #allocation5 [shape = 's32[2]{0}', space=sflag, size = 0x8, scoped, tag = 'scoped memory for tpu_custom_call.1']
    #allocation6 [shape = 'u8[16384]{0}', space=vmem, size = 0x4000, scoped, tag = 'input window, operand 1']
    #allocation7 [shape = 's32[2]{0}', space=sflag, size = 0x8, scoped, tag = 'scoped memory for tpu_custom_call.1']
    #allocation8 [shape = 'u8[4096]{0}', space=vmem, size = 0x1000, scoped, tag = 'output window, operand 0']
    %14 = vsyncpa [#allocation4], 0
    %s15 = scalar_lea.sflag [#allocation4], 1
    %16 = vsyncpa %s15, 0
    %17 = vsyncpa [#allocation7], 0
    %s18 = scalar_lea.sflag [#allocation7], 1
    %19 = vsyncpa %s18, 0
    %20 = vsyncpa [#allocation5], 0
    %s21 = scalar_lea.sflag [#allocation5], 1
    %22 = vsyncpa %s21, 0
    loop: start=0, step=1, limit=4
    $region2: #{tpu_custom_call.1} parent=1 // loop_pre_header
      _
    $region3: #{tpu_custom_call.1} parent=1 // loop_header
      %s24 = sphi 0, %s28
      %p25 = scmp.ge.s32.totalorder %s24, 4
      %s31 = sphi 0, %s43
      %s32 = sphi 0, %s39
      %s33 = sphi 0, %s31
      %s34 = sphi 0, %s32
      %s35 = sphi 0, %s33
      %s36 = sphi 0, %s34
      %s48 = sphi 0, %s50
      %s51 = sphi 0, %s48
      %s52 = sphi 0, %s51
      %s68 = sphi 0, %s52
      %s76 = sphi 0, %s78
      %s79 = sphi 0, %s76
      %s80 = sphi 0, %s79
      %s96 = sphi 0, %s80
      %s100 = sphi 0, %s100
      %s102 = sphi 0, %s100
      %s103 = sphi 0, %s102
      %s117 = sphi 0, %s103
      %s121 = sphi 0, %s121
      %s123 = sphi 0, %s121
      %s124 = sphi 0, %s123
      %s138 = sphi 0, %s124
      %s142 = sphi 0, %s142
      %s144 = sphi 0, %s142
      %s145 = sphi 0, %s144
      %s159 = sphi 0, %s145
      %s163 = sphi 0, %s163
      %s165 = sphi 0, %s163
      %s166 = sphi 0, %s165
      %s180 = sphi 0, %s166
      %s188 = sphi 0, %s190
      %s191 = sphi 0, %s188
      %s192 = sphi 0, %s191
      %s208 = sphi 0, %s192
      %s216 = sphi 0, %s218
      %s219 = sphi 0, %s216
      %s220 = sphi 0, %s219
      %s236 = sphi 0, %s220
    $region4: #{tpu_custom_call.1} parent=1 // loop_header_branch
      %27 = sbr.rel (%p25) target = $region8
    $region5: #{tpu_custom_call.1} parent=1 // loop_body
      %s29 = ssub.s32 %s24, 1
      %s30 = ssub.s32 %s24, 2
      %s37 = sadd.s32 1, %s32
      %p38 = scmp.ge.s32.totalorder %s37, 1
      %s39 = scalar_select %p38, 0, %s37
      %s40 = sadd.s32 1, %s31
      %s41 = scalar_select %p38, %s40, %s31
      %p42 = scmp.ge.s32.totalorder %s41, 2
      %s43 = scalar_select %p42, 0, %s41
      %s44 = ssub.s32 %s31, %s43
      %s45 = ssub.s32 %s32, %s39
      %s46 = sor.u32 %s44, %s45
      %p47 = scmp.eq.s32.totalorder %s46, 0
      %s49 = sadd.s32 %s48, 1
      %s50 = scalar_select %p47, %s48, %s49
      %p53 = pneg %p47
      %p54 = scmp.eq.s32.totalorder %s24, 1
      %p55 = por %p53, %p54
      %p56 = scmp.ne.s32.totalorder %s48, %s51
      %p57 = scmp.eq.s32.totalorder %s24, 0
      %p58 = por %p56, %p57
      %p59 = scmp.ne.s32.totalorder %s48, %s51
      %p60 = scmp.eq.s32.totalorder %s29, 1
      %p61 = por %p59, %p60
      %p62 = scmp.ne.s32.totalorder %s51, %s52
      %p63 = scmp.eq.s32.totalorder %s29, 0
      %p64 = por %p62, %p63
      %p65 = scmp.ne.s32.totalorder %s51, %s52
      %p66 = scmp.eq.s32.totalorder %s30, 1
      %p67 = por %p65, %p66
      %p69 = scmp.ne.s32.totalorder %s52, %s68
      %p70 = scmp.eq.s32.totalorder %s30, 0
      %p71 = por %p69, %p70
      %s72 = ssub.s32 %s31, %s43
      %s73 = ssub.s32 %s32, %s39
      %s74 = sor.u32 %s72, %s73
      %p75 = scmp.eq.s32.totalorder %s74, 0
      %s77 = sadd.s32 %s76, 1
      %s78 = scalar_select %p75, %s76, %s77
      %p81 = pneg %p75
      %p82 = scmp.eq.s32.totalorder %s24, 1
      %p83 = por %p81, %p82
      %p84 = scmp.ne.s32.totalorder %s76, %s79
      %p85 = scmp.eq.s32.totalorder %s24, 0
      %p86 = por %p84, %p85
      %p87 = scmp.ne.s32.totalorder %s76, %s79
      %p88 = scmp.eq.s32.totalorder %s29, 1
      %p89 = por %p87, %p88
      %p90 = scmp.ne.s32.totalorder %s79, %s80
      %p91 = scmp.eq.s32.totalorder %s29, 0
      %p92 = por %p90, %p91
      %p93 = scmp.ne.s32.totalorder %s79, %s80
      %p94 = scmp.eq.s32.totalorder %s30, 1
      %p95 = por %p93, %p94
      %p97 = scmp.ne.s32.totalorder %s80, %s96
      %p98 = scmp.eq.s32.totalorder %s30, 0
      %p99 = por %p97, %p98
      %s101 = sadd.s32 %s100, 1
      %p104 = scmp.eq.s32.totalorder %s24, 1
      %p105 = scmp.ne.s32.totalorder %s100, %s102
      %p106 = scmp.eq.s32.totalorder %s24, 0
      %p107 = por %p105, %p106
      %p108 = scmp.ne.s32.totalorder %s100, %s102
      %p109 = scmp.eq.s32.totalorder %s29, 1
      %p110 = por %p108, %p109
      %p111 = scmp.ne.s32.totalorder %s102, %s103
      %p112 = scmp.eq.s32.totalorder %s29, 0
      %p113 = por %p111, %p112
      %p114 = scmp.ne.s32.totalorder %s102, %s103
      %p115 = scmp.eq.s32.totalorder %s30, 1
      %p116 = por %p114, %p115
      %p118 = scmp.ne.s32.totalorder %s103, %s117
      %p119 = scmp.eq.s32.totalorder %s30, 0
      %p120 = por %p118, %p119
      %s122 = sadd.s32 %s121, 1
      %p125 = scmp.eq.s32.totalorder %s24, 1
      %p126 = scmp.ne.s32.totalorder %s121, %s123
      %p127 = scmp.eq.s32.totalorder %s24, 0
      %p128 = por %p126, %p127
      %p129 = scmp.ne.s32.totalorder %s121, %s123
      %p130 = scmp.eq.s32.totalorder %s29, 1
      %p131 = por %p129, %p130
      %p132 = scmp.ne.s32.totalorder %s123, %s124
      %p133 = scmp.eq.s32.totalorder %s29, 0
      %p134 = por %p132, %p133
      %p135 = scmp.ne.s32.totalorder %s123, %s124
      %p136 = scmp.eq.s32.totalorder %s30, 1
      %p137 = por %p135, %p136
      %p139 = scmp.ne.s32.totalorder %s124, %s138
      %p140 = scmp.eq.s32.totalorder %s30, 0
      %p141 = por %p139, %p140
      %s143 = sadd.s32 %s142, 1
      %p146 = scmp.eq.s32.totalorder %s24, 1
      %p147 = scmp.ne.s32.totalorder %s142, %s144
      %p148 = scmp.eq.s32.totalorder %s24, 0
      %p149 = por %p147, %p148
      %p150 = scmp.ne.s32.totalorder %s142, %s144
      %p151 = scmp.eq.s32.totalorder %s29, 1
      %p152 = por %p150, %p151
      %p153 = scmp.ne.s32.totalorder %s144, %s145
      %p154 = scmp.eq.s32.totalorder %s29, 0
      %p155 = por %p153, %p154
      %p156 = scmp.ne.s32.totalorder %s144, %s145
      %p157 = scmp.eq.s32.totalorder %s30, 1
      %p158 = por %p156, %p157
      %p160 = scmp.ne.s32.totalorder %s145, %s159
      %p161 = scmp.eq.s32.totalorder %s30, 0
      %p162 = por %p160, %p161
      %s164 = sadd.s32 %s163, 1
      %p167 = scmp.eq.s32.totalorder %s24, 1
      %p168 = scmp.ne.s32.totalorder %s163, %s165
      %p169 = scmp.eq.s32.totalorder %s24, 0
      %p170 = por %p168, %p169
      %p171 = scmp.ne.s32.totalorder %s163, %s165
      %p172 = scmp.eq.s32.totalorder %s29, 1
      %p173 = por %p171, %p172
      %p174 = scmp.ne.s32.totalorder %s165, %s166
      %p175 = scmp.eq.s32.totalorder %s29, 0
      %p176 = por %p174, %p175
      %p177 = scmp.ne.s32.totalorder %s165, %s166
      %p178 = scmp.eq.s32.totalorder %s30, 1
      %p179 = por %p177, %p178
      %p181 = scmp.ne.s32.totalorder %s166, %s180
      %p182 = scmp.eq.s32.totalorder %s30, 0
      %p183 = por %p181, %p182
      %s184 = ssub.s32 %s31, %s43
      %s185 = ssub.s32 %s32, %s39
      %s186 = sor.u32 %s184, %s185
      %p187 = scmp.eq.s32.totalorder %s186, 0
      %s189 = sadd.s32 %s188, 1
      %s190 = scalar_select %p187, %s188, %s189
      %p193 = pneg %p187
      %p194 = scmp.eq.s32.totalorder %s24, 1
      %p195 = por %p193, %p194
      %p196 = scmp.ne.s32.totalorder %s188, %s191
      %p197 = scmp.eq.s32.totalorder %s24, 0
      %p198 = por %p196, %p197
      %p199 = scmp.ne.s32.totalorder %s188, %s191
      %p200 = scmp.eq.s32.totalorder %s29, 1
      %p201 = por %p199, %p200
      %p202 = scmp.ne.s32.totalorder %s191, %s192
      %p203 = scmp.eq.s32.totalorder %s29, 0
      %p204 = por %p202, %p203
      %p205 = scmp.ne.s32.totalorder %s191, %s192
      %p206 = scmp.eq.s32.totalorder %s30, 1
      %p207 = por %p205, %p206
      %p209 = scmp.ne.s32.totalorder %s192, %s208
      %p210 = scmp.eq.s32.totalorder %s30, 0
      %p211 = por %p209, %p210
      %s212 = ssub.s32 %s31, %s43
      %s213 = ssub.s32 %s32, %s39
      %s214 = sor.u32 %s212, %s213
      %p215 = scmp.eq.s32.totalorder %s214, 0
      %s217 = sadd.s32 %s216, 1
      %s218 = scalar_select %p215, %s216, %s217
      %p221 = pneg %p215
      %p222 = scmp.eq.s32.totalorder %s24, 1
      %p223 = por %p221, %p222
      %p224 = scmp.ne.s32.totalorder %s216, %s219
      %p225 = scmp.eq.s32.totalorder %s24, 0
      %p226 = por %p224, %p225
      %p227 = scmp.ne.s32.totalorder %s216, %s219
      %p228 = scmp.eq.s32.totalorder %s29, 1
      %p229 = por %p227, %p228
      %p230 = scmp.ne.s32.totalorder %s219, %s220
      %p231 = scmp.eq.s32.totalorder %s29, 0
      %p232 = por %p230, %p231
      %p233 = scmp.ne.s32.totalorder %s219, %s220
      %p234 = scmp.eq.s32.totalorder %s30, 1
      %p235 = por %p233, %p234
      %p237 = scmp.ne.s32.totalorder %s220, %s236
      %p238 = scmp.eq.s32.totalorder %s30, 0
      %p239 = por %p237, %p238
      %p240 = scmp.le.s32.totalorder 1, %s24
      %p241 = scmp.lt.s32.totalorder %s24, 3
      %p242 = pnand %p240, %p241
      %p243 = pneg %p242
      // Predicated region
      $region9: #{tpu_custom_call.1} parent=5 // pred_check
        _
      $region10: #{tpu_custom_call.1} parent=5 // pred_check_branch
        %245 = sbr.rel (%p242) target = $region12
      $region11: #{tpu_custom_call.1} parent=5 // pred_region
        %s246 = ssub.s32 %s24, 1
        // Predicated region
        $region13: #{tpu_custom_call.1} parent=11 // pred_check
          %p247 = pneg %p113
        $region14: #{tpu_custom_call.1} parent=11 // pred_check_branch
          %249 = sbr.rel (%p247) target = $region16
        $region15: #{tpu_custom_call.1} parent=11 // pred_region
          _
        $region16: #{tpu_custom_call.1} parent=11 // pred_fallthru
          _
        // Predicated region
        $region17: #{tpu_custom_call.1} parent=11 // pred_check
          %p250 = pneg %p134
        $region18: #{tpu_custom_call.1} parent=11 // pred_check_branch
          %252 = sbr.rel (%p250) target = $region20
        $region19: #{tpu_custom_call.1} parent=11 // pred_region
          _
        $region20: #{tpu_custom_call.1} parent=11 // pred_fallthru
          _
        // Predicated region
        $region21: #{tpu_custom_call.1} parent=11 // pred_check
          %p253 = pneg %p155
        $region22: #{tpu_custom_call.1} parent=11 // pred_check_branch
          %255 = sbr.rel (%p253) target = $region24
        $region23: #{tpu_custom_call.1} parent=11 // pred_region
          _
        $region24: #{tpu_custom_call.1} parent=11 // pred_fallthru
          _
        // Predicated region
        $region25: #{tpu_custom_call.1} parent=11 // pred_check
          %p256 = pneg %p176
        $region26: #{tpu_custom_call.1} parent=11 // pred_check_branch
          %258 = sbr.rel (%p256) target = $region28
        $region27: #{tpu_custom_call.1} parent=11 // pred_region
          _
        $region28: #{tpu_custom_call.1} parent=11 // pred_fallthru
          _
      $region12: #{tpu_custom_call.1} parent=5 // pred_fallthru
        _
      %p259 = scmp.lt.s32.totalorder %s24, 2
      // Predicated region
      $region29: #{tpu_custom_call.1} parent=5 // pred_check
        %p260 = pneg %p259
      $region30: #{tpu_custom_call.1} parent=5 // pred_check_branch
        %262 = sbr.rel (%p260) target = $region32
      $region31: #{tpu_custom_call.1} parent=5 // pred_region
        // Predicated region
        $region33: #{tpu_custom_call.1} parent=31 // pred_check
          %p263 = pneg %p58
        $region34: #{tpu_custom_call.1} parent=31 // pred_check_branch
          %265 = sbr.rel (%p263) target = $region36
        $region35: #{tpu_custom_call.1} parent=31 // pred_region
          %s266 = sand.u32 %s48, 1
          %s267 = scalar_lea.sflag [#allocation4], %s266
          %s268 = sand.u32 %s48, 1
          %s269 = smul.addr %s268, 32
          %s270 = scalar_lea.vmem [#allocation3], %s269
          %s271 = smul.u32 4, %s32
          %s273 = ssub.s32 512, 512
          %274 = vsyncadd %s267, %s273
          %s275 = smul.addr %s31, 4
          %s276 = sadd.s32 %s271, %s275
          %s277 = smul.addr %s276, 128
          %s278 = scalar_lea.hbm %s0, %s277
          %s280 = sshll.u32 %s270, 4
          %s281 = int_to_ptr.vmem [resolvable:$true] %s280
          %283 = dma.hbm_to_vmem [thread:$0]  %s278, 512, %s281, %s267
        $region36: #{tpu_custom_call.1} parent=31 // pred_fallthru
          _
        // Predicated region
        $region37: #{tpu_custom_call.1} parent=31 // pred_check
          %p284 = pneg %p86
        $region38: #{tpu_custom_call.1} parent=31 // pred_check_branch
          %286 = sbr.rel (%p284) target = $region40
        $region39: #{tpu_custom_call.1} parent=31 // pred_region
          %s287 = sand.u32 %s76, 1
          %s288 = scalar_lea.sflag [#allocation7], %s287
          %s289 = sand.u32 %s76, 1
          %s290 = smul.addr %s289, 16
          %s291 = scalar_lea.vmem [#allocation6], %s290
          %s292 = smul.u32 4, %s32
          %s294 = ssub.s32 256, 256
          %295 = vsyncadd %s288, %s294
          %s296 = smul.addr %s31, 4
          %s297 = sadd.s32 %s292, %s296
          %s298 = smul.addr %s297, 64
          %s299 = scalar_lea.hbm %s1, %s298
          %s301 = sshll.u32 %s291, 4
          %s302 = int_to_ptr.vmem [resolvable:$true] %s301
          %304 = dma.hbm_to_vmem [thread:$0]  %s299, 256, %s302, %s288
        $region40: #{tpu_custom_call.1} parent=31 // pred_fallthru
          _
      $region32: #{tpu_custom_call.1} parent=5 // pred_fallthru
        _
      %p305 = scmp.le.s32.totalorder 1, %s24
      %p306 = scmp.lt.s32.totalorder %s24, 3
      %p307 = pnand %p305, %p306
      %p308 = pneg %p307
      // Predicated region
      $region41: #{tpu_custom_call.1} parent=5 // pred_check
        _
      $region42: #{tpu_custom_call.1} parent=5 // pred_check_branch
        %310 = sbr.rel (%p307) target = $region44
      $region43: #{tpu_custom_call.1} parent=5 // pred_region
        %s311 = ssub.s32 %s24, 1
        %s312 = sand.u32 %s51, 1
        %s313 = scalar_lea.sflag [#allocation4], %s312
        %s314 = sand.u32 %s51, 1
        %s315 = smul.addr %s314, 32
        %s316 = scalar_lea.vmem [#allocation3], %s315
        // Predicated region
        $region45: #{tpu_custom_call.1} parent=43 // pred_check
          %p317 = pneg %p64
        $region46: #{tpu_custom_call.1} parent=43 // pred_check_branch
          %319 = sbr.rel (%p317) target = $region48
        $region47: #{tpu_custom_call.1} parent=43 // pred_region
          %320 = dma.done %s313, 512
        $region48: #{tpu_custom_call.1} parent=43 // pred_fallthru
          _
        %s321 = sand.u32 %s79, 1
        %s322 = scalar_lea.sflag [#allocation7], %s321
        %s323 = sand.u32 %s79, 1
        %s324 = smul.addr %s323, 16
        %s325 = scalar_lea.vmem [#allocation6], %s324
        // Predicated region
        $region49: #{tpu_custom_call.1} parent=43 // pred_check
          %p326 = pneg %p92
        $region50: #{tpu_custom_call.1} parent=43 // pred_check_branch
          %328 = sbr.rel (%p326) target = $region52
        $region51: #{tpu_custom_call.1} parent=43 // pred_region
          %329 = dma.done %s322, 256
        $region52: #{tpu_custom_call.1} parent=43 // pred_fallthru
          _
        %s330 = sand.u32 %s51, 1
        %s331 = scalar_lea.sflag [#allocation4], %s330
        %s332 = sand.u32 %s51, 1
        %s333 = smul.addr %s332, 32
        %s334 = scalar_lea.vmem [#allocation3], %s333
        %p335 = pneg %p64
        %p336 = pneg %p61
        %s337 = sand.u32 %s79, 1
        %s338 = scalar_lea.sflag [#allocation7], %s337
        %s339 = sand.u32 %s79, 1
        %s340 = smul.addr %s339, 16
        %s341 = scalar_lea.vmem [#allocation6], %s340
        %p342 = pneg %p92
        %p343 = pneg %p89
        %p344 = pneg %p113
        %p345 = pneg %p110
        %p346 = pneg %p134
        %p347 = pneg %p131
        %p348 = pneg %p155
        %p349 = pneg %p152
        %p350 = pneg %p176
        %p351 = pneg %p173
        %p352 = pneg %p204
        %p353 = pneg %p201
        %s354 = sand.u32 %s191, 1
        %s355 = scalar_lea.sflag [#allocation5], %s354
        %s356 = sand.u32 %s191, 1
        %s357 = smul.addr %s356, 4
        %s358 = scalar_lea.vmem [#allocation8], %s357
        %p359 = pneg %p232
        %p360 = pneg %p229
        %p361 = scmp.lt.s32.totalorder %s33, 1
        %s362 = scalar_select %p361, %s33, 1
        %p363 = scmp.lt.s32.totalorder %s34, 0
        %s364 = scalar_select %p363, %s34, 0
        %s365 = sadd.s32 %s364, %s362
        %s366 = smul.addr %s365, 8
        %s367 = scalar_lea.vmem %s7, %s366
        %s368 = smul.u32 4, %s34
        %s369 = smul.u32 4, %s34
        %s370 = smul.u32 4, %s34
        %p371 = scmp.lt.s32.totalorder %s33, 1
        %s372 = scalar_select %p371, %s33, 1
        %p373 = scmp.lt.s32.totalorder %s34, 0
        %s374 = scalar_select %p373, %s34, 0
        %s375 = sadd.s32 %s374, %s372
        %s376 = smul.addr %s375, 8
        %s377 = scalar_lea.vmem %s7, %s376
        %v378 = vld [vmem:[%s316] sm:$0xff]
        %v379 = vld [vmem:[%s316 + $0x8] sm:$0xff]
        %v380 = vld [vmem:[%s316 + $0x10] sm:$0xff]
        %v381 = vld [vmem:[%s316 + $0x18] sm:$0xff]
        %v382 = vld [vmem:[%s325] sm:$0xff]
        %v383 = vld [vmem:[%s325 + $0x8] sm:$0xff]
        %v384 = vld [vmem:[%s2] sm:$0xf]
        %v387 = vcombine.high %v382, %v382
        %v388 = vcombine.high %v383, %v383
        %vm391 = vcmask 64512
        %v393 = vsel %vm391, %v384, 0
        %395 = vmatprep.subr.mxu0 %v379
        %396 = vmatpush1.msra.mxu0 %v378
        %397 = vmatprep.subr.mxu0 0.0
        %398 = vmatpush1.msra.mxu0 0.0
        %399 = vmatprep.subr.mxu0 0.0
        %400 = vmatpush1.msra.mxu0 0.0
        %401 = vmatprep.subr.mxu0 0.0
        %402 = vmatpush1.msra.mxu0 0.0
        %403 = vmatprep.subr.mxu0 0.0
        %404 = vmatpush1.msra.mxu0 0.0
        %405 = vmatprep.subr.mxu0 0.0
        %406 = vmatpush1.msra.mxu0 0.0
        %407 = vmatprep.subr.mxu0 0.0
        %408 = vmatpush1.msra.mxu0 0.0
        %409 = vmatprep.subr.mxu0 0.0
        %410 = vmatpush1.msra.mxu0 0.0
        %411 = vmatprep.subr.mxu0 0.0
        %412 = vmatpush1.msra.mxu0 0.0
        %413 = vmatprep.subr.mxu0 0.0
        %414 = vmatpush1.msra.mxu0 0.0
        %415 = vmatprep.subr.mxu0 0.0
        %416 = vmatpush1.msra.mxu0 0.0
        %417 = vmatprep.subr.mxu0 0.0
        %418 = vmatpush1.msra.mxu0 0.0
        %419 = vmatprep.subr.mxu0 0.0
        %420 = vmatpush1.msra.mxu0 0.0
        %421 = vmatprep.subr.mxu0 0.0
        %422 = vmatpush1.msra.mxu0 0.0
        %423 = vmatprep.subr.mxu0 0.0
        %424 = vmatpush1.msra.mxu0 0.0
        %425 = vmatprep.subr.mxu0 0.0
        %426 = vmatpush1.msra.mxu0 0.0
        %427 = vmatprep.subr.mxu0 0.0
        %428 = vmatpush1.msra.mxu0 0.0
        %429 = vmatprep.subr.mxu0 0.0
        %430 = vmatpush1.msra.mxu0 0.0
        %431 = vmatprep.subr.mxu0 0.0
        %432 = vmatpush1.msra.mxu0 0.0
        %433 = vmatprep.subr.mxu0 0.0
        %434 = vmatpush1.msra.mxu0 0.0
        %435 = vmatprep.subr.mxu0 0.0
        %436 = vmatpush1.msra.mxu0 0.0
        %437 = vmatprep.subr.mxu0 0.0
        %438 = vmatpush1.msra.mxu0 0.0
        %439 = vmatprep.subr.mxu0 0.0
        %440 = vmatpush1.msra.mxu0 0.0
        %441 = vmatprep.subr.mxu0 0.0
        %442 = vmatpush1.msra.mxu0 0.0
        %443 = vmatprep.subr.mxu0 0.0
        %444 = vmatpush1.msra.mxu0 0.0
        %445 = vmatprep.subr.mxu0 0.0
        %446 = vmatpush1.msra.mxu0 0.0
        %447 = vmatprep.subr.mxu0 0.0
        %448 = vmatpush1.msra.mxu0 0.0
        %449 = vmatprep.subr.mxu0 0.0
        %450 = vmatpush1.msra.mxu0 0.0
        %451 = vmatprep.subr.mxu0 0.0
        %452 = vmatpush1.msra.mxu0 0.0
        %453 = vmatprep.subr.mxu0 0.0
        %454 = vmatpush1.msra.mxu0 0.0
        %455 = vmatprep.subr.mxu0 0.0
        %456 = vmatpush1.msra.mxu0 0.0
        %457 = vmatprep.subr.mxu0 0.0
        %458 = vmatpush1.msra.mxu0 0.0
        %459 = vmatprep.mubr.f32.mxu0 0.0
        %460 = vmatmul.mubr.f32.gmra.mrb[0].mxu0 %v393
        %v461 = vpop.f32.mrb[0].mxu0
        %v462 = vadd.f32 %v382, %v461
        %v463 = vpop.f32.mrb[0].mxu0
        %v464 = vadd.f32 %v387, %v463
        %465 = vdwg.mxu0
        %466 = vmatprep.subr.mxu0 %v381
        %467 = vmatpush1.msra.mxu0 %v380
        %468 = vmatprep.subr.mxu0 0.0
        %469 = vmatpush1.msra.mxu0 0.0
        %470 = vmatprep.subr.mxu0 0.0
        %471 = vmatpush1.msra.mxu0 0.0
        %472 = vmatprep.subr.mxu0 0.0
        %473 = vmatpush1.msra.mxu0 0.0
        %474 = vmatprep.subr.mxu0 0.0
        %475 = vmatpush1.msra.mxu0 0.0
        %476 = vmatprep.subr.mxu0 0.0
        %477 = vmatpush1.msra.mxu0 0.0
        %478 = vmatprep.subr.mxu0 0.0
        %479 = vmatpush1.msra.mxu0 0.0
        %480 = vmatprep.subr.mxu0 0.0
        %481 = vmatpush1.msra.mxu0 0.0
        %482 = vmatprep.subr.mxu0 0.0
        %483 = vmatpush1.msra.mxu0 0.0
        %484 = vmatprep.subr.mxu0 0.0
        %485 = vmatpush1.msra.mxu0 0.0
        %486 = vmatprep.subr.mxu0 0.0
        %487 = vmatpush1.msra.mxu0 0.0
        %488 = vmatprep.subr.mxu0 0.0
        %489 = vmatpush1.msra.mxu0 0.0
        %490 = vmatprep.subr.mxu0 0.0
        %491 = vmatpush1.msra.mxu0 0.0
        %492 = vmatprep.subr.mxu0 0.0
        %493 = vmatpush1.msra.mxu0 0.0
        %494 = vmatprep.subr.mxu0 0.0
        %495 = vmatpush1.msra.mxu0 0.0
        %496 = vmatprep.subr.mxu0 0.0
        %497 = vmatpush1.msra.mxu0 0.0
        %498 = vmatprep.subr.mxu0 0.0
        %499 = vmatpush1.msra.mxu0 0.0
        %500 = vmatprep.subr.mxu0 0.0
        %501 = vmatpush1.msra.mxu0 0.0
        %502 = vmatprep.subr.mxu0 0.0
        %503 = vmatpush1.msra.mxu0 0.0
        %504 = vmatprep.subr.mxu0 0.0
        %505 = vmatpush1.msra.mxu0 0.0
        %506 = vmatprep.subr.mxu0 0.0
        %507 = vmatpush1.msra.mxu0 0.0
        %508 = vmatprep.subr.mxu0 0.0
        %509 = vmatpush1.msra.mxu0 0.0
        %510 = vmatprep.subr.mxu0 0.0
        %511 = vmatpush1.msra.mxu0 0.0
        %512 = vmatprep.subr.mxu0 0.0
        %513 = vmatpush1.msra.mxu0 0.0
        %514 = vmatprep.subr.mxu0 0.0
        %515 = vmatpush1.msra.mxu0 0.0
        %516 = vmatprep.subr.mxu0 0.0
        %517 = vmatpush1.msra.mxu0 0.0
        %518 = vmatprep.subr.mxu0 0.0
        %519 = vmatpush1.msra.mxu0 0.0
        %520 = vmatprep.subr.mxu0 0.0
        %521 = vmatpush1.msra.mxu0 0.0
        %522 = vmatprep.subr.mxu0 0.0
        %523 = vmatpush1.msra.mxu0 0.0
        %524 = vmatprep.subr.mxu0 0.0
        %525 = vmatpush1.msra.mxu0 0.0
        %526 = vmatprep.subr.mxu0 0.0
        %527 = vmatpush1.msra.mxu0 0.0
        %528 = vmatprep.subr.mxu0 0.0
        %529 = vmatpush1.msra.mxu0 0.0
        %530 = vmatprep.mubr.f32.mxu0 0.0
        %531 = vmatmul.mubr.f32.gmra.mrb[0].mxu0 %v393
        %v532 = vpop.f32.mrb[0].mxu0
        %v533 = vadd.f32 %v383, %v532
        %v534 = vpop.f32.mrb[0].mxu0
        %v535 = vadd.f32 %v388, %v534
        %536 = vdwg.mxu0
        %v537 = vmax.f32 %v462, 0.0
        %v538 = vmax.f32 %v464, 0.0
        %v539 = vmax.f32 %v533, 0.0
        %v540 = vmax.f32 %v535, 0.0
        %v541 = vld [vmem:[%s3] sm:$0xf]
        %543 = vset.pattern.permute.xlu0 0
        %544 = vperm.xlu0 %543, %v541
        %v545 = vpop.permute.xlu0 %544
        %v547 = vmul.f32 %v537, %v545
        %v548 = vmul.f32 %v538, %v545
        %v549 = vmul.f32 %v539, %v545
        %v550 = vmul.f32 %v540, %v545
        %vm551 = vcmask 1043456
        %v552 = vsel %vm551, %v547, 0.0
        %v553 = vrot.slane %v552, 4
        %v554 = vadd.f32 %v552, %v553
        %v555 = vrot.slane %v554, 2
        %v556 = vadd.f32 %v554, %v555
        %v557 = vrot.slane %v556, 1
        %v558 = vadd.f32 %v556, %v557
        %v559 = vsel %vm551, %v548, 0.0
        %v560 = vrot.slane %v559, 4
        %v561 = vadd.f32 %v559, %v560
        %v562 = vrot.slane %v561, 2
        %v563 = vadd.f32 %v561, %v562
        %v564 = vrot.slane %v563, 1
        %v565 = vadd.f32 %v563, %v564
        %v566 = vsel %vm551, %v549, 0.0
        %v567 = vrot.slane %v566, 4
        %v568 = vadd.f32 %v566, %v567
        %v569 = vrot.slane %v568, 2
        %v570 = vadd.f32 %v568, %v569
        %v571 = vrot.slane %v570, 1
        %v572 = vadd.f32 %v570, %v571
        %v573 = vsel %vm551, %v550, 0.0
        %v574 = vrot.slane %v573, 4
        %v575 = vadd.f32 %v573, %v574
        %v576 = vrot.slane %v575, 2
        %v577 = vadd.f32 %v575, %v576
        %v578 = vrot.slane %v577, 1
        %v579 = vadd.f32 %v577, %v578
        %s580 = sld [smem:[#allocation2]]
        %v581 = vstv %s580
        %v582 = vadd.f32 %v558, %v581
        %v583 = vadd.f32 %v565, %v581
        %v584 = vadd.f32 %v572, %v581
        %v585 = vadd.f32 %v579, %v581
        %v586 = vxor.u32 %v582, 2147483648
        %v587 = vxor.u32 %v583, 2147483648
        %v588 = vxor.u32 %v584, 2147483648
        %v589 = vxor.u32 %v585, 2147483648
        %v590 = vmul.f32 %v586, 1.442695
        %v591 = vpow.pop %v590
        %v592 = vmul.f32 %v587, 1.442695
        %v593 = vpow.pop %v592
        %v594 = vmul.f32 %v588, 1.442695
        %v595 = vpow.pop %v594
        %v596 = vmul.f32 %v589, 1.442695
        %v597 = vpow.pop %v596
        %v598 = vadd.f32 %v591, 1.0
        %v599 = vadd.f32 %v593, 1.0
        %v600 = vadd.f32 %v595, 1.0
        %v601 = vadd.f32 %v597, 1.0
        %v602 = vrcp.pop %v598
        %v603 = vmul.f32 1.0, %v602
        %v604 = vrcp.pop %v599
        %v605 = vmul.f32 1.0, %v604
        %v606 = vrcp.pop %v600
        %v607 = vmul.f32 1.0, %v606
        %v608 = vrcp.pop %v601
        %v609 = vmul.f32 1.0, %v608
        %v614 = vcombine.low %v603, %v605
        %v615 = vcombine.low %v607, %v609
        %v617 = vunpack.c.l.s4 1966171168
        %v618 = vunpack.c.0.s8 %v617
        %v619 = vlaneseq
        %v620 = vshrl.u32 %v619, 7
        %v621 = vsub.s32 %v618, %v620
        %v622 = vrot.slane %v614, %v621
        %v624 = vunpack.c.l.s4 1966171168
        %v625 = vunpack.c.0.s8 %v624
        %v626 = vlaneseq
        %v627 = vshrl.u32 %v626, 7
        %v628 = vsub.s32 %v625, %v627
        %v629 = vrot.slane %v615, %v628
        %v630 = vcombine.low %v622, %v629
        %v632 = vunpack.c.l.s4 1966171168
        %v633 = vunpack.c.0.s8 %v632
        %v634 = vlaneseq
        %v635 = vshrl.u32 %v634, 7
        %v636 = vsub.s32 %v633, %v635
        %v637 = vrot.slane %v630, %v636
        %v639 = vlaneseq
        %vm640 = vcmp.ge.s32.totalorder %v639, 0
        %vm641 = vcmp.lt.s32.totalorder %v639, 512
        %vm642 = vmand %vm640, %vm641
        %643 = vst.msk [vmem:[%s358] sm:$0xf] %vm642, %v637
        %v644 = vmul.f32 %v603, %v378
        %v645 = vmul.f32 %v605, %v379
        %v646 = vmul.f32 %v607, %v380
        %v647 = vmul.f32 %v609, %v381
        %v648 = vld [vmem:[%s5] sm:$0xff]
        %v650 = vsel %vm391, %v648, 0
        %652 = vmatprep.subr.mxu0 %v645
        %653 = vmatpush1.msra.mxu0 %v644
        %654 = vmatprep.subr.mxu0 0.0
        %655 = vmatpush1.msra.mxu0 0.0
        %656 = vmatprep.subr.mxu0 0.0
        %657 = vmatpush1.msra.mxu0 0.0
        %658 = vmatprep.subr.mxu0 0.0
        %659 = vmatpush1.msra.mxu0 0.0
        %660 = vmatprep.subr.mxu0 0.0
        %661 = vmatpush1.msra.mxu0 0.0
        %662 = vmatprep.subr.mxu0 0.0
        %663 = vmatpush1.msra.mxu0 0.0
        %664 = vmatprep.subr.mxu0 0.0
        %665 = vmatpush1.msra.mxu0 0.0
        %666 = vmatprep.subr.mxu0 0.0
        %667 = vmatpush1.msra.mxu0 0.0
        %668 = vmatprep.subr.mxu0 0.0
        %669 = vmatpush1.msra.mxu0 0.0
        %670 = vmatprep.subr.mxu0 0.0
        %671 = vmatpush1.msra.mxu0 0.0
        %672 = vmatprep.subr.mxu0 0.0
        %673 = vmatpush1.msra.mxu0 0.0
        %674 = vmatprep.subr.mxu0 0.0
        %675 = vmatpush1.msra.mxu0 0.0
        %676 = vmatprep.subr.mxu0 0.0
        %677 = vmatpush1.msra.mxu0 0.0
        %678 = vmatprep.subr.mxu0 0.0
        %679 = vmatpush1.msra.mxu0 0.0
        %680 = vmatprep.subr.mxu0 0.0
        %681 = vmatpush1.msra.mxu0 0.0
        %682 = vmatprep.subr.mxu0 0.0
        %683 = vmatpush1.msra.mxu0 0.0
        %684 = vmatprep.subr.mxu0 0.0
        %685 = vmatpush1.msra.mxu0 0.0
        %686 = vmatprep.subr.mxu0 0.0
        %687 = vmatpush1.msra.mxu0 0.0
        %688 = vmatprep.subr.mxu0 0.0
        %689 = vmatpush1.msra.mxu0 0.0
        %690 = vmatprep.subr.mxu0 0.0
        %691 = vmatpush1.msra.mxu0 0.0
        %692 = vmatprep.subr.mxu0 0.0
        %693 = vmatpush1.msra.mxu0 0.0
        %694 = vmatprep.subr.mxu0 0.0
        %695 = vmatpush1.msra.mxu0 0.0
        %696 = vmatprep.subr.mxu0 0.0
        %697 = vmatpush1.msra.mxu0 0.0
        %698 = vmatprep.subr.mxu0 0.0
        %699 = vmatpush1.msra.mxu0 0.0
        %700 = vmatprep.subr.mxu0 0.0
        %701 = vmatpush1.msra.mxu0 0.0
        %702 = vmatprep.subr.mxu0 0.0
        %703 = vmatpush1.msra.mxu0 0.0
        %704 = vmatprep.subr.mxu0 0.0
        %705 = vmatpush1.msra.mxu0 0.0
        %706 = vmatprep.subr.mxu0 0.0
        %707 = vmatpush1.msra.mxu0 0.0
        %708 = vmatprep.subr.mxu0 0.0
        %709 = vmatpush1.msra.mxu0 0.0
        %710 = vmatprep.subr.mxu0 0.0
        %711 = vmatpush1.msra.mxu0 0.0
        %712 = vmatprep.subr.mxu0 0.0
        %713 = vmatpush1.msra.mxu0 0.0
        %714 = vmatprep.subr.mxu0 0.0
        %715 = vmatpush1.msra.mxu0 0.0
        %716 = vmatprep.mubr.f32.mxu0 0.0
        %717 = vmatmul.mubr.f32.gmra.mrb[0].mxu0 %v650
        %v718 = vpop.f32.mrb[0].mxu0
        %v719 = vadd.f32 0.0, %v718
        %v720 = vpop.f32.mrb[0].mxu0
        %v721 = vadd.f32 0.0, %v720
        %722 = vdwg.mxu0
        %723 = vmatprep.subr.mxu0 %v647
        %724 = vmatpush1.msra.mxu0 %v646
        %725 = vmatprep.subr.mxu0 0.0
        %726 = vmatpush1.msra.mxu0 0.0
        %727 = vmatprep.subr.mxu0 0.0
        %728 = vmatpush1.msra.mxu0 0.0
        %729 = vmatprep.subr.mxu0 0.0
        %730 = vmatpush1.msra.mxu0 0.0
        %731 = vmatprep.subr.mxu0 0.0
        %732 = vmatpush1.msra.mxu0 0.0
        %733 = vmatprep.subr.mxu0 0.0
        %734 = vmatpush1.msra.mxu0 0.0
        %735 = vmatprep.subr.mxu0 0.0
        %736 = vmatpush1.msra.mxu0 0.0
        %737 = vmatprep.subr.mxu0 0.0
        %738 = vmatpush1.msra.mxu0 0.0
        %739 = vmatprep.subr.mxu0 0.0
        %740 = vmatpush1.msra.mxu0 0.0
        %741 = vmatprep.subr.mxu0 0.0
        %742 = vmatpush1.msra.mxu0 0.0
        %743 = vmatprep.subr.mxu0 0.0
        %744 = vmatpush1.msra.mxu0 0.0
        %745 = vmatprep.subr.mxu0 0.0
        %746 = vmatpush1.msra.mxu0 0.0
        %747 = vmatprep.subr.mxu0 0.0
        %748 = vmatpush1.msra.mxu0 0.0
        %749 = vmatprep.subr.mxu0 0.0
        %750 = vmatpush1.msra.mxu0 0.0
        %751 = vmatprep.subr.mxu0 0.0
        %752 = vmatpush1.msra.mxu0 0.0
        %753 = vmatprep.subr.mxu0 0.0
        %754 = vmatpush1.msra.mxu0 0.0
        %755 = vmatprep.subr.mxu0 0.0
        %756 = vmatpush1.msra.mxu0 0.0
        %757 = vmatprep.subr.mxu0 0.0
        %758 = vmatpush1.msra.mxu0 0.0
        %759 = vmatprep.subr.mxu0 0.0
        %760 = vmatpush1.msra.mxu0 0.0
        %761 = vmatprep.subr.mxu0 0.0
        %762 = vmatpush1.msra.mxu0 0.0
        %763 = vmatprep.subr.mxu0 0.0
        %764 = vmatpush1.msra.mxu0 0.0
        %765 = vmatprep.subr.mxu0 0.0
        %766 = vmatpush1.msra.mxu0 0.0
        %767 = vmatprep.subr.mxu0 0.0
        %768 = vmatpush1.msra.mxu0 0.0
        %769 = vmatprep.subr.mxu0 0.0
        %770 = vmatpush1.msra.mxu0 0.0
        %771 = vmatprep.subr.mxu0 0.0
        %772 = vmatpush1.msra.mxu0 0.0
        %773 = vmatprep.subr.mxu0 0.0
        %774 = vmatpush1.msra.mxu0 0.0
        %775 = vmatprep.subr.mxu0 0.0
        %776 = vmatpush1.msra.mxu0 0.0
        %777 = vmatprep.subr.mxu0 0.0
        %778 = vmatpush1.msra.mxu0 0.0
        %779 = vmatprep.subr.mxu0 0.0
        %780 = vmatpush1.msra.mxu0 0.0
        %781 = vmatprep.subr.mxu0 0.0
        %782 = vmatpush1.msra.mxu0 0.0
        %783 = vmatprep.subr.mxu0 0.0
        %784 = vmatpush1.msra.mxu0 0.0
        %785 = vmatprep.subr.mxu0 0.0
        %786 = vmatpush1.msra.mxu0 0.0
        %787 = vmatprep.mubr.f32.mxu0 0.0
        %788 = vmatmul.mubr.f32.gmra.mrb[0].mxu0 %v650
        %v789 = vpop.f32.mrb[0].mxu0
        %v790 = vadd.f32 0.0, %v789
        %v791 = vpop.f32.mrb[0].mxu0
        %v792 = vadd.f32 0.0, %v791
        %793 = vdwg.mxu0
        %v794 = vadd.f32 %v719, %v721
        %v795 = vadd.f32 %v794, %v790
        %v796 = vadd.f32 %v795, %v792
        %797 = vadd.xlane.f32.xlu0 %v796
        %v798 = vpop.xlane.xlu0 %797
        %vm799 = vcmask 7168
        %800 = vst.msk [vmem:[%s377] sm:$0xff] %vm799, %v798
        %v801 = vmul.f32 %v719, %v719
        %v802 = vmul.f32 %v721, %v721
        %v803 = vmul.f32 %v790, %v790
        %v804 = vmul.f32 %v792, %v792
        %v805 = vadd.f32 %v801, %v802
        %v806 = vadd.f32 %v805, %v803
        %v807 = vadd.f32 %v806, %v804
        %808 = vadd.xlane.f32.xlu0 %v807
        %v809 = vpop.xlane.xlu0 %808
        %vm810 = vcmask 15368
        %811 = vst.msk [vmem:[%s377] sm:$0xff] %vm810, %v809
        %s812 = sand.u32 %s191, 1
        %s813 = scalar_lea.sflag [#allocation5], %s812
        %s814 = sand.u32 %s191, 1
        %s815 = smul.addr %s814, 4
        %s816 = scalar_lea.vmem [#allocation8], %s815
        %p817 = scmp.lt.s32.totalorder %s33, 1
        %s818 = scalar_select %p817, %s33, 1
        %p819 = scmp.lt.s32.totalorder %s34, 0
        %s820 = scalar_select %p819, %s34, 0
        %s821 = sadd.s32 %s820, %s818
        %s822 = smul.addr %s821, 8
        %s823 = scalar_lea.vmem %s7, %s822
        // Predicated region
        $region53: #{tpu_custom_call.1} parent=43 // pred_check
          %p824 = pneg %p201
        $region54: #{tpu_custom_call.1} parent=43 // pred_check_branch
          %826 = sbr.rel (%p824) target = $region56
        $region55: #{tpu_custom_call.1} parent=43 // pred_region
          %s827 = smul.u32 4, %s34
          %s829 = ssub.s32 64, 64
          %830 = vsyncadd %s813, %s829
          %s831 = smul.addr %s33, 4
          %s832 = sadd.s32 %s827, %s831
          %s833 = smul.addr %s832, 16
          %s834 = scalar_lea.hbm %s6, %s833
          %s836 = sshll.u32 %s816, 4
          %s837 = int_to_ptr.vmem [resolvable:$true] %s836
          %839 = dma.vmem_to_hbm [thread:$0]  %s837, 64, %s834, %s813
        $region56: #{tpu_custom_call.1} parent=43 // pred_fallthru
          _
        // Predicated region
        $region57: #{tpu_custom_call.1} parent=43 // pred_check
          %p840 = pneg %p229
        $region58: #{tpu_custom_call.1} parent=43 // pred_check_branch
          %842 = sbr.rel (%p840) target = $region60
        $region59: #{tpu_custom_call.1} parent=43 // pred_region
          _
        $region60: #{tpu_custom_call.1} parent=43 // pred_fallthru
          _
      $region44: #{tpu_custom_call.1} parent=5 // pred_fallthru
        _
      %p843 = scmp.le.s32.totalorder 2, %s24
      // Predicated region
      $region61: #{tpu_custom_call.1} parent=5 // pred_check
        %p844 = pneg %p843
      $region62: #{tpu_custom_call.1} parent=5 // pred_check_branch
        %846 = sbr.rel (%p844) target = $region64
      $region63: #{tpu_custom_call.1} parent=5 // pred_region
        %s847 = ssub.s32 %s24, 2
        // Predicated region
        $region65: #{tpu_custom_call.1} parent=63 // pred_check
          %p848 = pneg %p207
        $region66: #{tpu_custom_call.1} parent=63 // pred_check_branch
          %850 = sbr.rel (%p848) target = $region68
        $region67: #{tpu_custom_call.1} parent=63 // pred_region
          %s851 = sand.u32 %s192, 1
          %s852 = scalar_lea.sflag [#allocation5], %s851
          %s853 = sand.u32 %s192, 1
          %s854 = smul.addr %s853, 4
          %s855 = scalar_lea.vmem [#allocation8], %s854
          %856 = dma.done %s852, 64
        $region68: #{tpu_custom_call.1} parent=63 // pred_fallthru
          _
        // Predicated region
        $region69: #{tpu_custom_call.1} parent=63 // pred_check
          %p857 = pneg %p235
        $region70: #{tpu_custom_call.1} parent=63 // pred_check_branch
          %859 = sbr.rel (%p857) target = $region72
        $region71: #{tpu_custom_call.1} parent=63 // pred_region
          %p860 = scmp.lt.s32.totalorder %s35, 1
          %s861 = scalar_select %p860, %s35, 1
          %p862 = scmp.lt.s32.totalorder %s36, 0
          %s863 = scalar_select %p862, %s36, 0
          %s864 = sadd.s32 %s863, %s861
          %s865 = smul.addr %s864, 8
          %s866 = scalar_lea.vmem %s7, %s865
        $region72: #{tpu_custom_call.1} parent=63 // pred_fallthru
          _
      $region64: #{tpu_custom_call.1} parent=5 // pred_fallthru
        _
    $region6: #{tpu_custom_call.1} parent=1 // loop_footer
      %s28 = sadd.s32 1, %s24
    $region7: #{tpu_custom_call.1} parent=1 // loop_footer_branch
      %23 = sbr.rel target = $region3
    $region8: #{tpu_custom_call.1} parent=1 // loop_exit
      _
    %867 = vsyncpa [#allocation4], 1
    %s868 = scalar_lea.sflag [#allocation4], 1
    %869 = vsyncpa %s868, 1
    %870 = vsyncpa [#allocation7], 1
    %s871 = scalar_lea.sflag [#allocation7], 1
    %872 = vsyncpa %s871, 1
    %873 = vsyncpa [#allocation5], 1
    %s874 = scalar_lea.sflag [#allocation5], 1
    %875 = vsyncpa %s874, 1

</llo_original>
